<compile_context>
chip_gen: v5e
topology: v5e:2x2
jax: 0.10.0
libtpu: 0.0.40
codegen_flags: <defaults>
</compile_context>

<pallas_src>
import functools

import jax
import jax.numpy as jnp
from jax import lax
from jax.experimental import pallas as pl
from jax.experimental.pallas import tpu as pltpu


def _round_up(x, m):
    return (x + m - 1) // m * m


def _dan_bpe_kernel(idx_ref, emb_ref, w1_ref, b1_ref, w2_ref, b2_ref, out_ref,
                    *, seq_len, out_dim, counts_dtype):
    """One batch tile of the DAN forward.

    idx_ref : (TB, L)   int32  -- streamed per grid step (double-buffered)
    emb_ref : (Vp, Ep)  bf16   -- resident (single-buffered, same block each step)
    w1_ref  : (Ep, Hp)  bf16   -- resident
    b1_ref  : (1, Hp)   f32    -- resident
    w2_ref  : (Hp, Op)  bf16   -- resident
    b2_ref  : (1, Op)   f32    -- resident
    out_ref : (TB, Op)  f32    -- streamed per grid step
    """
    idx = idx_ref[...]                                   # (TB, L) int32
    tb = idx.shape[0]
    vp = emb_ref.shape[0]
    op = out_ref.shape[1]

    # --- token-count histogram (TB, Vp), one sequence position at a time ---
    # Peak live data is O(TB*Vp); never builds a (TB, L, Vp) tensor. L is a
    # small static constant, so this Python loop is fully unrolled.
    # TODO(synk): for large L*Vp, bound vreg live ranges by accumulating the
    # histogram per V-chunk (or switch to the gather path above) instead of a
    # fully-unrolled compare+add chain.
    vocab_iota = lax.broadcasted_iota(jnp.int32, (tb, vp), 1)
    counts = jnp.zeros((tb, vp), jnp.float32)
    for l in range(seq_len):
        counts = counts + (idx[:, l:l + 1] == vocab_iota).astype(jnp.float32)

    # --- mean embedding via counts @ emb on the MXU ---
    # bf16 operands (counts <= L are exactly representable when L <= 256),
    # f32 accumulation; the 1/L scale is applied AFTER the matmul (B*E muls
    # instead of B*V).
    summed = jnp.dot(counts.astype(counts_dtype), emb_ref[...],
                     preferred_element_type=jnp.float32)          # (TB, Ep)
    avg_emb = summed * (1.0 / seq_len)

    # --- fc1 + relu (bf16 operands, f32 accumulation, f32 bias add) ---
    h = jnp.dot(avg_emb.astype(jnp.bfloat16), w1_ref[...],
                preferred_element_type=jnp.float32) + b1_ref[...]  # (TB, Hp)
    h = jnp.maximum(h, 0.0)

    # --- fc2 (bf16 operands, f32 accumulation) ---
    logits = jnp.dot(h.astype(jnp.bfloat16), w2_ref[...],
                     preferred_element_type=jnp.float32) + b2_ref[...]  # (TB, Op)

    # --- mask lane padding (columns >= out_dim), then row-wise log_softmax ---
    # Safe because out_dim >= 1 (at least one real column per row).
    col = lax.broadcasted_iota(jnp.int32, (tb, op), 1)
    logits = jnp.where(col < out_dim, logits, jnp.float32(-1e30))
    m = jnp.max(logits, axis=-1, keepdims=True)
    shifted = logits - m
    lse = jnp.log(jnp.sum(jnp.exp(shifted), axis=-1, keepdims=True))
    out_ref[...] = shifted - lse


def prepare_dan_bpe_params(emb, w1, b1, w2, b2):
    """One-time parameter preparation (hoisted out of the hot path).

    Pads V/E/H/O to multiples of 128 (full-width MXU passes, lane-dense
    stores) and casts the matmul weights to bf16. Returns (padded_params,
    dims). Call once at parameter-load time and reuse across forwards.
    """
    V, E = emb.shape
    H = w1.shape[1]
    O = w2.shape[1]
    Vp, Ep, Hp, Op = (_round_up(d, 128) for d in (V, E, H, O))

    emb_p = jnp.zeros((Vp, Ep), jnp.bfloat16).at[:V, :E].set(
        emb.astype(jnp.bfloat16))
    w1_p = jnp.zeros((Ep, Hp), jnp.bfloat16).at[:E, :H].set(
        w1.astype(jnp.bfloat16))
    b1_p = jnp.zeros((1, Hp), jnp.float32).at[0, :H].set(b1.astype(jnp.float32))
    w2_p = jnp.zeros((Hp, Op), jnp.bfloat16).at[:H, :O].set(
        w2.astype(jnp.bfloat16))
    b2_p = jnp.zeros((1, Op), jnp.float32).at[0, :O].set(b2.astype(jnp.float32))

    dims = dict(V=V, E=E, H=H, O=O, Vp=Vp, Ep=Ep, Hp=Hp, Op=Op)
    return (emb_p, w1_p, b1_p, w2_p, b2_p), dims


def _vmem_limit_bytes(Vp, Ep, Hp, Op, tb, L):
    """Headroom-aware VMEM limit from the actual buffer sizes."""
    # Resident, single-buffered blocks (bf16 weights, f32 biases; biases pad
    # to 8 sublanes in VMEM).
    resident = (Vp * Ep + Ep * Hp + Hp * Op) * 2 + 8 * (Hp + Op) * 4
    # Streamed blocks are double-buffered (idx pads its last dim to 128 lanes).
    streamed = 2 * (tb * max(L, 128) * 4 + tb * Op * 4)
    # In-kernel temporaries (counts f32 + bf16 copy, activations) + slack for
    # compiler-internal scratch.
    scratch = tb * Vp * 6 + tb * (Ep + Hp + 2 * Op) * 4 + (2 << 20)

    limit = int((resident + streamed + scratch) * 1.5) + (4 << 20)
    try:
        # Cap at ~75% of physical VMEM: ~48 MiB on v7x (64 MiB/TC),
        # ~96 MiB on v5e/v6e (128 MiB), leaving room for internal scratch.
        cap = int(pltpu.get_tpu_info().vmem_capacity_bytes) * 3 // 4
    except Exception:
        cap = 48 << 20  # conservative fallback (fits every generation)
    return max(min(limit, cap), 16 << 20)


def dan_bpe_apply(padded_params, dims, subword_indices, *, batch_tile=128):
    """Hot-path forward. padded_params/dims from prepare_dan_bpe_params.

    batch_tile: 128 is a good generation-agnostic default (v5e MXU is
    4x128x128); pass 256 on v6e/v7x for large batches. The tile is shrunk
    automatically for small batches. The batch grid axis is "parallel".
    """
    emb_p, w1_p, b1_p, w2_p, b2_p = padded_params
    O = dims["O"]
    Vp, Ep, Hp, Op = dims["Vp"], dims["Ep"], dims["Hp"], dims["Op"]

    subword_indices = subword_indices.astype(jnp.int32)
    B, L = subword_indices.shape

    # Adaptive, sublane-aligned batch tile (16-aligned: the bf16 counts LHS
    # packs two rows per sublane).
    tb = _round_up(min(batch_tile, _round_up(B, 16)), 8)
    Bp = _round_up(B, tb)

    # Only the idx padding stays in the hot path; padded rows are all-zero
    # tokens and are sliced off at the end.
    idx_p = jnp.zeros((Bp, L), jnp.int32).at[:B, :].set(subword_indices)

    # Integer counts are exact in bf16 only up to 256.
    counts_dtype = jnp.bfloat16 if L <= 256 else jnp.float32

    kernel = functools.partial(
        _dan_bpe_kernel, seq_len=L, out_dim=O, counts_dtype=counts_dtype)

    def resident(shape):
        # Grid-invariant block: single-buffered (no need for the default
        # double buffer), DMA'd once and reused across the whole batch grid.
        return pl.BlockSpec(shape, lambda i: (0, 0),
                            pipeline_mode=pl.Buffered(1))

    out_p = pl.pallas_call(
        kernel,
        out_shape=jax.ShapeDtypeStruct((Bp, Op), jnp.float32),
        grid=(Bp // tb,),
        in_specs=[
            pl.BlockSpec((tb, L), lambda i: (i, 0)),   # idx: streamed
            resident((Vp, Ep)),                        # emb: resident
            resident((Ep, Hp)),                        # w1:  resident
            resident((1, Hp)),                         # b1:  resident
            resident((Hp, Op)),                        # w2:  resident
            resident((1, Op)),                         # b2:  resident
        ],
        out_specs=pl.BlockSpec((tb, Op), lambda i: (i, 0)),
        compiler_params=pltpu.CompilerParams(
            dimension_semantics=("parallel",),
            vmem_limit_bytes=_vmem_limit_bytes(Vp, Ep, Hp, Op, tb, L),
        ),
    )(idx_p, emb_p, w1_p, b1_p, w2_p, b2_p)

    return out_p[:B, :O]


def dan_bpe_forward(subword_indices, emb, w1, b1, w2, b2, *, batch_tile=128):
    """Convenience wrapper: prepare params (once per call here) + apply."""
    params, dims = prepare_dan_bpe_params(emb, w1, b1, w2, b2)
    return dan_bpe_apply(params, dims, subword_indices, batch_tile=batch_tile)


def reference_forward(subword_indices, emb, w1, b1, w2, b2):
    """Plain-JAX reference mirroring the PyTorch forward."""
    embedded = emb[subword_indices]                    # (B, L, E)
    avg = jnp.mean(embedded, axis=1)                   # (B, E)
    x = jax.nn.relu(avg @ w1 + b1)
    x = x @ w2 + b2
    return jax.nn.log_softmax(x, axis=1)


if __name__ == "__main__":
    # Small, deterministic config consistent with the module's __init__.
    vocab_size, embedding_dim, hidden_dim, output_dim = 32, 16, 32, 8
    batch, seq_len = 2, 8

    key = jax.random.PRNGKey(0)
    k_emb, k_w1, k_b1, k_w2, k_b2, k_idx = jax.random.split(key, 6)

    emb = jax.random.normal(k_emb, (vocab_size, embedding_dim), jnp.float32) * 0.1
    emb = emb.at[0].set(0.0)  # padding_idx=0 row is zero, as in nn.Embedding
    w1 = jax.random.normal(k_w1, (embedding_dim, hidden_dim), jnp.float32) * 0.1
    b1 = jax.random.normal(k_b1, (hidden_dim,), jnp.float32) * 0.1
    w2 = jax.random.normal(k_w2, (hidden_dim, output_dim), jnp.float32) * 0.1
    b2 = jax.random.normal(k_b2, (output_dim,), jnp.float32) * 0.1

    subword_indices = jax.random.randint(
        k_idx, (batch, seq_len), 0, vocab_size, dtype=jnp.int32)
    # include some padding tokens (index 0) like real BPE batches
    subword_indices = subword_indices.at[:, -2:].set(0)

    # Params are prepared once (padding/casts hoisted out of the hot path).
    params, dims = prepare_dan_bpe_params(emb, w1, b1, w2, b2)
    out = dan_bpe_apply(params, dims, subword_indices)
    out = jax.block_until_ready(out)
    assert out.shape == (batch, output_dim)
    assert bool(jnp.all(jnp.isfinite(out)))

    # Full-f32 reference: loose tolerance because the kernel uses bf16 MXU
    # operands (emb/w1/w2 and intermediate activations) with f32 accumulation.
    ref_f32 = reference_forward(subword_indices, emb, w1, b1, w2, b2)
    assert jnp.allclose(out, ref_f32, atol=2e-2, rtol=2e-2), (out, ref_f32)

    print("KERNEL_OK")
</pallas_src>

<mosaic_0001>
module attributes {stable_mosaic.version = 11 : i64} {
  func.func @_dan_bpe_kernel(%arg0: i32, %arg1: memref<16x8xi32, #tpu.memory_space<vmem>>, %arg2: memref<128x128xbf16, #tpu.memory_space<vmem>>, %arg3: memref<128x128xbf16, #tpu.memory_space<vmem>>, %arg4: memref<1x128xf32, #tpu.memory_space<vmem>>, %arg5: memref<128x128xbf16, #tpu.memory_space<vmem>>, %arg6: memref<1x128xf32, #tpu.memory_space<vmem>>, %arg7: memref<16x128xf32, #tpu.memory_space<vmem>>) attributes {dimension_semantics = [#tpu.dimension_semantics<parallel>], iteration_bounds = array<i64: 1>, scalar_prefetch = 0 : i64, scratch_operands = 0 : i64, tpu.core_type = #tpu.core_type<tc>, window_params = [{transform_indices = @transform_0, window_bounds = array<i64: 16, 8>}, {pipeline_mode = #tpu.pipeline_mode<synchronous>, transform_indices = @transform_1, window_bounds = array<i64: 128, 128>}, {pipeline_mode = #tpu.pipeline_mode<synchronous>, transform_indices = @transform_2, window_bounds = array<i64: 128, 128>}, {pipeline_mode = #tpu.pipeline_mode<synchronous>, transform_indices = @transform_3, window_bounds = array<i64: 1, 128>}, {pipeline_mode = #tpu.pipeline_mode<synchronous>, transform_indices = @transform_4, window_bounds = array<i64: 128, 128>}, {pipeline_mode = #tpu.pipeline_mode<synchronous>, transform_indices = @transform_5, window_bounds = array<i64: 1, 128>}, {transform_indices = @transform_6, window_bounds = array<i64: 16, 128>}]} {
    %c0 = arith.constant 0 : index
    %c0_0 = arith.constant 0 : index
    %0 = vector.load %arg1[%c0, %c0_0] : memref<16x8xi32, #tpu.memory_space<vmem>>, vector<16x8xi32>
    %1 = tpu.iota {dimensions = array<i32: 1>} : vector<16x128xi32>
    %cst = arith.constant 0.000000e+00 : f32
    %2 = vector.broadcast %cst : f32 to vector<16x128xf32>
    %3 = vector.extract_strided_slice %0 {offsets = [0, 0], sizes = [16, 1], strides = [1, 1]} : vector<16x8xi32> to vector<16x1xi32>
    %4 = vector.broadcast %3 : vector<16x1xi32> to vector<16x128xi32>
    %5 = arith.cmpi eq, %4, %1 : vector<16x128xi32>
    %6 = arith.extui %5 : vector<16x128xi1> to vector<16x128xi32>
    %7 = arith.sitofp %6 : vector<16x128xi32> to vector<16x128xf32>
    %8 = arith.addf %2, %7 : vector<16x128xf32>
    %9 = vector.extract_strided_slice %0 {offsets = [0, 1], sizes = [16, 1], strides = [1, 1]} : vector<16x8xi32> to vector<16x1xi32>
    %10 = vector.broadcast %9 : vector<16x1xi32> to vector<16x128xi32>
    %11 = arith.cmpi eq, %10, %1 : vector<16x128xi32>
    %12 = arith.extui %11 : vector<16x128xi1> to vector<16x128xi32>
    %13 = arith.sitofp %12 : vector<16x128xi32> to vector<16x128xf32>
    %14 = arith.addf %8, %13 : vector<16x128xf32>
    %15 = vector.extract_strided_slice %0 {offsets = [0, 2], sizes = [16, 1], strides = [1, 1]} : vector<16x8xi32> to vector<16x1xi32>
    %16 = vector.broadcast %15 : vector<16x1xi32> to vector<16x128xi32>
    %17 = arith.cmpi eq, %16, %1 : vector<16x128xi32>
    %18 = arith.extui %17 : vector<16x128xi1> to vector<16x128xi32>
    %19 = arith.sitofp %18 : vector<16x128xi32> to vector<16x128xf32>
    %20 = arith.addf %14, %19 : vector<16x128xf32>
    %21 = vector.extract_strided_slice %0 {offsets = [0, 3], sizes = [16, 1], strides = [1, 1]} : vector<16x8xi32> to vector<16x1xi32>
    %22 = vector.broadcast %21 : vector<16x1xi32> to vector<16x128xi32>
    %23 = arith.cmpi eq, %22, %1 : vector<16x128xi32>
    %24 = arith.extui %23 : vector<16x128xi1> to vector<16x128xi32>
    %25 = arith.sitofp %24 : vector<16x128xi32> to vector<16x128xf32>
    %26 = arith.addf %20, %25 : vector<16x128xf32>
    %27 = vector.extract_strided_slice %0 {offsets = [0, 4], sizes = [16, 1], strides = [1, 1]} : vector<16x8xi32> to vector<16x1xi32>
    %28 = vector.broadcast %27 : vector<16x1xi32> to vector<16x128xi32>
    %29 = arith.cmpi eq, %28, %1 : vector<16x128xi32>
    %30 = arith.extui %29 : vector<16x128xi1> to vector<16x128xi32>
    %31 = arith.sitofp %30 : vector<16x128xi32> to vector<16x128xf32>
    %32 = arith.addf %26, %31 : vector<16x128xf32>
    %33 = vector.extract_strided_slice %0 {offsets = [0, 5], sizes = [16, 1], strides = [1, 1]} : vector<16x8xi32> to vector<16x1xi32>
    %34 = vector.broadcast %33 : vector<16x1xi32> to vector<16x128xi32>
    %35 = arith.cmpi eq, %34, %1 : vector<16x128xi32>
    %36 = arith.extui %35 : vector<16x128xi1> to vector<16x128xi32>
    %37 = arith.sitofp %36 : vector<16x128xi32> to vector<16x128xf32>
    %38 = arith.addf %32, %37 : vector<16x128xf32>
    %39 = vector.extract_strided_slice %0 {offsets = [0, 6], sizes = [16, 1], strides = [1, 1]} : vector<16x8xi32> to vector<16x1xi32>
    %40 = vector.broadcast %39 : vector<16x1xi32> to vector<16x128xi32>
    %41 = arith.cmpi eq, %40, %1 : vector<16x128xi32>
    %42 = arith.extui %41 : vector<16x128xi1> to vector<16x128xi32>
    %43 = arith.sitofp %42 : vector<16x128xi32> to vector<16x128xf32>
    %44 = arith.addf %38, %43 : vector<16x128xf32>
    %45 = vector.extract_strided_slice %0 {offsets = [0, 7], sizes = [16, 1], strides = [1, 1]} : vector<16x8xi32> to vector<16x1xi32>
    %46 = vector.broadcast %45 : vector<16x1xi32> to vector<16x128xi32>
    %47 = arith.cmpi eq, %46, %1 : vector<16x128xi32>
    %48 = arith.extui %47 : vector<16x128xi1> to vector<16x128xi32>
    %49 = arith.sitofp %48 : vector<16x128xi32> to vector<16x128xf32>
    %50 = arith.addf %44, %49 : vector<16x128xf32>
    %51 = arith.truncf %50 : vector<16x128xf32> to vector<16x128xbf16>
    %c0_1 = arith.constant 0 : index
    %c0_2 = arith.constant 0 : index
    %52 = vector.load %arg2[%c0_1, %c0_2] : memref<128x128xbf16, #tpu.memory_space<vmem>>, vector<128x128xbf16>
    %cst_3 = arith.constant dense<0.000000e+00> : vector<16x128xf32>
    %53 = tpu.matmul %51, %52, %cst_3 {dimension_numbers = #tpu.dot_dimension_numbers<[1], [0], [0], [1], [0, 0, 1, 1], [], []>} : vector<16x128xbf16>, vector<128x128xbf16>, vector<16x128xf32> -> vector<16x128xf32>
    %cst_4 = arith.constant 1.250000e-01 : f32
    %54 = vector.broadcast %cst_4 : f32 to vector<16x128xf32>
    %55 = arith.mulf %53, %54 : vector<16x128xf32>
    %56 = arith.truncf %55 : vector<16x128xf32> to vector<16x128xbf16>
    %c0_5 = arith.constant 0 : index
    %c0_6 = arith.constant 0 : index
    %57 = vector.load %arg3[%c0_5, %c0_6] : memref<128x128xbf16, #tpu.memory_space<vmem>>, vector<128x128xbf16>
    %cst_7 = arith.constant dense<0.000000e+00> : vector<16x128xf32>
    %58 = tpu.matmul %56, %57, %cst_7 {dimension_numbers = #tpu.dot_dimension_numbers<[1], [0], [0], [1], [0, 0, 1, 1], [], []>} : vector<16x128xbf16>, vector<128x128xbf16>, vector<16x128xf32> -> vector<16x128xf32>
    %c0_8 = arith.constant 0 : index
    %c0_9 = arith.constant 0 : index
    %59 = vector.load %arg4[%c0_8, %c0_9] : memref<1x128xf32, #tpu.memory_space<vmem>>, vector<1x128xf32>
    %60 = vector.broadcast %59 : vector<1x128xf32> to vector<16x128xf32>
    %61 = arith.addf %58, %60 : vector<16x128xf32>
    %cst_10 = arith.constant 0.000000e+00 : f32
    %62 = vector.broadcast %cst_10 : f32 to vector<16x128xf32>
    %63 = arith.maximumf %61, %62 : vector<16x128xf32>
    %64 = arith.truncf %63 : vector<16x128xf32> to vector<16x128xbf16>
    %c0_11 = arith.constant 0 : index
    %c0_12 = arith.constant 0 : index
    %65 = vector.load %arg5[%c0_11, %c0_12] : memref<128x128xbf16, #tpu.memory_space<vmem>>, vector<128x128xbf16>
    %cst_13 = arith.constant dense<0.000000e+00> : vector<16x128xf32>
    %66 = tpu.matmul %64, %65, %cst_13 {dimension_numbers = #tpu.dot_dimension_numbers<[1], [0], [0], [1], [0, 0, 1, 1], [], []>} : vector<16x128xbf16>, vector<128x128xbf16>, vector<16x128xf32> -> vector<16x128xf32>
    %c0_14 = arith.constant 0 : index
    %c0_15 = arith.constant 0 : index
    %67 = vector.load %arg6[%c0_14, %c0_15] : memref<1x128xf32, #tpu.memory_space<vmem>>, vector<1x128xf32>
    %68 = vector.broadcast %67 : vector<1x128xf32> to vector<16x128xf32>
    %69 = arith.addf %66, %68 : vector<16x128xf32>
    %70 = tpu.iota {dimensions = array<i32: 1>} : vector<16x128xi32>
    %c8_i32 = arith.constant 8 : i32
    %71 = vector.broadcast %c8_i32 : i32 to vector<16x128xi32>
    %72 = arith.cmpi slt, %70, %71 : vector<16x128xi32>
    %cst_16 = arith.constant -1.000000e+30 : f32
    %73 = vector.broadcast %cst_16 : f32 to vector<16x128xf32>
    %74 = arith.select %72, %69, %73 : vector<16x128xi1>, vector<16x128xf32>
    %cst_17 = arith.constant dense<0xFF800000> : vector<16xf32>
    %75 = vector.multi_reduction <maximumf>, %74, %cst_17 [1] : vector<16x128xf32> to vector<16xf32>
    %76 = vector.shape_cast %75 : vector<16xf32> to vector<16x1xf32>
    %77 = vector.broadcast %76 : vector<16x1xf32> to vector<16x128xf32>
    %78 = arith.subf %74, %77 : vector<16x128xf32>
    %79 = math.exp %78 : vector<16x128xf32>
    %cst_18 = arith.constant dense<0.000000e+00> : vector<16xf32>
    %80 = vector.multi_reduction <add>, %79, %cst_18 [1] : vector<16x128xf32> to vector<16xf32>
    %81 = vector.shape_cast %80 : vector<16xf32> to vector<16x1xf32>
    %82 = math.log %81 : vector<16x1xf32>
    %83 = vector.broadcast %82 : vector<16x1xf32> to vector<16x128xf32>
    %84 = arith.subf %78, %83 : vector<16x128xf32>
    %c0_19 = arith.constant 0 : index
    %c0_20 = arith.constant 0 : index
    %85 = vector.load %arg7[%c0_19, %c0_20] : memref<16x128xf32, #tpu.memory_space<vmem>>, vector<16x128xf32>
    tpu.vector_store %arg7[%c0_19, %c0_20], %84 {strides = array<i32>} : memref<16x128xf32, #tpu.memory_space<vmem>>, vector<16x128xf32>,
    return
  }
  func.func @transform_0(%arg0: i32) -> (i32, i32) {
    %c0_i32 = arith.constant 0 : i32
    %c0_i32_0 = arith.constant 0 : i32
    return %arg0, %c0_i32 : i32, i32
  }
  func.func @transform_1(%arg0: i32) -> (i32, i32) {
    %c0_i32 = arith.constant 0 : i32
    %c0_i32_0 = arith.constant 0 : i32
    %c0_i32_1 = arith.constant 0 : i32
    return %c0_i32, %c0_i32_0 : i32, i32
  }
  func.func @transform_2(%arg0: i32) -> (i32, i32) {
    %c0_i32 = arith.constant 0 : i32
    %c0_i32_0 = arith.constant 0 : i32
    %c0_i32_1 = arith.constant 0 : i32
    return %c0_i32, %c0_i32_0 : i32, i32
  }
  func.func @transform_3(%arg0: i32) -> (i32, i32) {
    %c0_i32 = arith.constant 0 : i32
    %c0_i32_0 = arith.constant 0 : i32
    %c0_i32_1 = arith.constant 0 : i32
    return %c0_i32, %c0_i32_0 : i32, i32
  }
  func.func @transform_4(%arg0: i32) -> (i32, i32) {
    %c0_i32 = arith.constant 0 : i32
    %c0_i32_0 = arith.constant 0 : i32
    %c0_i32_1 = arith.constant 0 : i32
    return %c0_i32, %c0_i32_0 : i32, i32
  }
  func.func @transform_5(%arg0: i32) -> (i32, i32) {
    %c0_i32 = arith.constant 0 : i32
    %c0_i32_0 = arith.constant 0 : i32
    %c0_i32_1 = arith.constant 0 : i32
    return %c0_i32, %c0_i32_0 : i32, i32
  }
  func.func @transform_6(%arg0: i32) -> (i32, i32) {
    %c0_i32 = arith.constant 0 : i32
    %c0_i32_0 = arith.constant 0 : i32
    return %arg0, %c0_i32 : i32, i32
  }
}

</mosaic_0001>

<llo_original>
// kernel: tpu_custom_call.1
$region0: #{tpu_custom_call.1}
  #allocation0 [shape = 'u32[]', space=smem, size = 0x4, offset = 0x4, fixed_abs, tag = 'smem constant byte address 0x4 - core index']
  #allocation1 [shape = 'u32[72,128]{1,0:T(1,128)}', space=vmem, size = 0x9000, scoped, tag = 'internal scratch']
  %s0 = inlined_call_operand.vmem [shape: s32[16,8], index: 0, kind: input, shape index: {}]
  %s1 = inlined_call_operand.hbm [shape: bf16[128,128], index: 1, kind: input, shape index: {}]
  %s2 = inlined_call_operand.hbm [shape: bf16[128,128], index: 2, kind: input, shape index: {}]
  %s3 = inlined_call_operand.vmem [shape: f32[1,128], index: 3, kind: input, shape index: {}]
  %s4 = inlined_call_operand.hbm [shape: bf16[128,128], index: 4, kind: input, shape index: {}]
  %s5 = inlined_call_operand.vmem [shape: f32[1,128], index: 5, kind: input, shape index: {}]
  %s6 = inlined_call_operand.hbm [shape: f32[16,128], index: 6, kind: output, shape index: {}]
  %s7 = sld [smem:[#allocation0]]
  $region46: #{tpu_custom_call.1} parent=0
    _
  %s9 = ssub.s32 1, %s7
  %s10 = scalar_select 0, %s9, %s7
  $region1: #{tpu_custom_call.1} parent=0
    #allocation2 [shape = 'u8[32768]{0}', space=vmem, size = 0x8000, scoped, tag = 'input window, operand 1, single buffered']
    #allocation3 [shape = 's32[1]{0}', space=sflag, size = 0x4, scoped, tag = 'scoped memory for tpu_custom_call.1']
    #allocation4 [shape = 's32[1]{0}', space=sflag, size = 0x4, scoped, tag = 'scoped memory for tpu_custom_call.1']
    #allocation5 [shape = 'u8[32768]{0}', space=vmem, size = 0x8000, scoped, tag = 'input window, operand 2, single buffered']
    #allocation6 [shape = 's32[1]{0}', space=sflag, size = 0x4, scoped, tag = 'scoped memory for tpu_custom_call.1']
    #allocation7 [shape = 'u8[32768]{0}', space=vmem, size = 0x8000, scoped, tag = 'input window, operand 4, single buffered']
    #allocation8 [shape = 'u8[8192]{0}', space=vmem, size = 0x2000, scoped, tag = 'output window, operand 0, single buffered']
    %11 = vsyncpa [#allocation3], 0
    %12 = vsyncpa [#allocation6], 0
    %13 = vsyncpa [#allocation4], 0
    // Predicated region
    $region2: #{tpu_custom_call.1} parent=1 // pred_check
      _
    $region3: #{tpu_custom_call.1} parent=1 // pred_check_branch
      %15 = sbr.rel (0) target = $region5
    $region4: #{tpu_custom_call.1} parent=1 // pred_region
      _
    $region5: #{tpu_custom_call.1} parent=1 // pred_fallthru
      _
    // Predicated region
    $region6: #{tpu_custom_call.1} parent=1 // pred_check
      _
    $region7: #{tpu_custom_call.1} parent=1 // pred_check_branch
      %17 = sbr.rel (0) target = $region9
    $region8: #{tpu_custom_call.1} parent=1 // pred_region
      %19 = vsyncadd [#allocation3], 0
      %s20 = sshll.u32 %s1, 4
      %s21 = int_to_ptr.hbm [resolvable:$true] %s20
      %s22 = sshll.u32 [#allocation2], 4
      %s23 = int_to_ptr.vmem [resolvable:$true] %s22
      %28 = dma.hbm_to_vmem [thread:$0]  %s21, 1024, %s23, [#allocation3], 64, 64, 4
    $region9: #{tpu_custom_call.1} parent=1 // pred_fallthru
      _
    // Predicated region
    $region10: #{tpu_custom_call.1} parent=1 // pred_check
      _
    $region11: #{tpu_custom_call.1} parent=1 // pred_check_branch
      %30 = sbr.rel (0) target = $region13
    $region12: #{tpu_custom_call.1} parent=1 // pred_region
      %32 = vsyncadd [#allocation6], 0
      %s33 = sshll.u32 %s2, 4
      %s34 = int_to_ptr.hbm [resolvable:$true] %s33
      %s35 = sshll.u32 [#allocation5], 4
      %s36 = int_to_ptr.vmem [resolvable:$true] %s35
      %41 = dma.hbm_to_vmem [thread:$0]  %s34, 1024, %s36, [#allocation6], 64, 64, 4
    $region13: #{tpu_custom_call.1} parent=1 // pred_fallthru
      _
    // Predicated region
    $region14: #{tpu_custom_call.1} parent=1 // pred_check
      _
    $region15: #{tpu_custom_call.1} parent=1 // pred_check_branch
      %43 = sbr.rel (0) target = $region17
    $region16: #{tpu_custom_call.1} parent=1 // pred_region
      _
    $region17: #{tpu_custom_call.1} parent=1 // pred_fallthru
      _
    // Predicated region
    $region18: #{tpu_custom_call.1} parent=1 // pred_check
      _
    $region19: #{tpu_custom_call.1} parent=1 // pred_check_branch
      %45 = sbr.rel (0) target = $region21
    $region20: #{tpu_custom_call.1} parent=1 // pred_region
      %47 = vsyncadd [#allocation6], 0
      %s48 = sshll.u32 %s4, 4
      %s49 = int_to_ptr.hbm [resolvable:$true] %s48
      %s50 = sshll.u32 [#allocation7], 4
      %s51 = int_to_ptr.vmem [resolvable:$true] %s50
      %56 = dma.hbm_to_vmem [thread:$0]  %s49, 1024, %s51, [#allocation6], 64, 64, 4
    $region21: #{tpu_custom_call.1} parent=1 // pred_fallthru
      _
    // Predicated region
    $region22: #{tpu_custom_call.1} parent=1 // pred_check
      _
    $region23: #{tpu_custom_call.1} parent=1 // pred_check_branch
      %58 = sbr.rel (0) target = $region25
    $region24: #{tpu_custom_call.1} parent=1 // pred_region
      _
    $region25: #{tpu_custom_call.1} parent=1 // pred_fallthru
      _
    // Predicated region
    $region26: #{tpu_custom_call.1} parent=1 // pred_check
      _
    $region27: #{tpu_custom_call.1} parent=1 // pred_check_branch
      %60 = sbr.rel (0) target = $region29
    $region28: #{tpu_custom_call.1} parent=1 // pred_region
      %62 = dma.done [#allocation3], 1024
    $region29: #{tpu_custom_call.1} parent=1 // pred_fallthru
      _
    // Predicated region
    $region30: #{tpu_custom_call.1} parent=1 // pred_check
      _
    $region31: #{tpu_custom_call.1} parent=1 // pred_check_branch
      %64 = sbr.rel (0) target = $region33
    $region32: #{tpu_custom_call.1} parent=1 // pred_region
      %66 = dma.done [#allocation6], 1024
    $region33: #{tpu_custom_call.1} parent=1 // pred_fallthru
      _
    // Predicated region
    $region34: #{tpu_custom_call.1} parent=1 // pred_check
      _
    $region35: #{tpu_custom_call.1} parent=1 // pred_check_branch
      %68 = sbr.rel (0) target = $region37
    $region36: #{tpu_custom_call.1} parent=1 // pred_region
      %70 = dma.done [#allocation6], 1024
    $region37: #{tpu_custom_call.1} parent=1 // pred_fallthru
      _
    %v71 = vld [vmem:[%s0] sm:$0xff]
    %v72 = vld [vmem:[%s0 + $0x8] sm:$0xff]
    %v73 = vlaneseq
    %v74 = vand.u32 %v73, 127
    %75 = vset.pattern.permute.xlu0 0
    %76 = vperm.xlu0 %75, %v71
    %v77 = vpop.permute.xlu0 %76
    %78 = vset.pattern.permute.xlu0 0
    %79 = vperm.xlu0 %78, %v72
    %v80 = vpop.permute.xlu0 %79
    %vm81 = vcmp.eq.s32.totalorder %v77, %v74
    %vm82 = vcmp.eq.s32.totalorder %v80, %v74
    %v83 = vsel %vm81, 1, 0
    %v84 = vsel %vm82, 1, 0
    %v85 = vcvt.s32.f32 %v83
    %v86 = vcvt.s32.f32 %v84
    %v87 = vadd.f32 %v85, 0.0
    %v88 = vadd.f32 %v86, 0.0
    %89 = vset.pattern.permute.xlu0 1
    %90 = vperm.xlu0 %89, %v71
    %v91 = vpop.permute.xlu0 %90
    %92 = vset.pattern.permute.xlu0 1
    %93 = vperm.xlu0 %92, %v72
    %v94 = vpop.permute.xlu0 %93
    %vm95 = vcmp.eq.s32.totalorder %v91, %v74
    %vm96 = vcmp.eq.s32.totalorder %v94, %v74
    %v97 = vsel %vm95, 1, 0
    %v98 = vsel %vm96, 1, 0
    %v99 = vcvt.s32.f32 %v97
    %v100 = vcvt.s32.f32 %v98
    %v101 = vadd.f32 %v87, %v99
    %v102 = vadd.f32 %v88, %v100
    %103 = vset.pattern.permute.xlu0 2
    %104 = vperm.xlu0 %103, %v71
    %v105 = vpop.permute.xlu0 %104
    %106 = vset.pattern.permute.xlu0 2
    %107 = vperm.xlu0 %106, %v72
    %v108 = vpop.permute.xlu0 %107
    %vm109 = vcmp.eq.s32.totalorder %v105, %v74
    %vm110 = vcmp.eq.s32.totalorder %v108, %v74
    %v111 = vsel %vm109, 1, 0
    %v112 = vsel %vm110, 1, 0
    %v113 = vcvt.s32.f32 %v111
    %v114 = vcvt.s32.f32 %v112
    %v115 = vadd.f32 %v101, %v113
    %v116 = vadd.f32 %v102, %v114
    %117 = vset.pattern.permute.xlu0 3
    %118 = vperm.xlu0 %117, %v71
    %v119 = vpop.permute.xlu0 %118
    %120 = vset.pattern.permute.xlu0 3
    %121 = vperm.xlu0 %120, %v72
    %v122 = vpop.permute.xlu0 %121
    %vm123 = vcmp.eq.s32.totalorder %v119, %v74
    %vm124 = vcmp.eq.s32.totalorder %v122, %v74
    %v125 = vsel %vm123, 1, 0
    %v126 = vsel %vm124, 1, 0
    %v127 = vcvt.s32.f32 %v125
    %v128 = vcvt.s32.f32 %v126
    %v129 = vadd.f32 %v115, %v127
    %v130 = vadd.f32 %v116, %v128
    %131 = vset.pattern.permute.xlu0 4
    %132 = vperm.xlu0 %131, %v71
    %v133 = vpop.permute.xlu0 %132
    %134 = vset.pattern.permute.xlu0 4
    %135 = vperm.xlu0 %134, %v72
    %v136 = vpop.permute.xlu0 %135
    %vm137 = vcmp.eq.s32.totalorder %v133, %v74
    %vm138 = vcmp.eq.s32.totalorder %v136, %v74
    %v139 = vsel %vm137, 1, 0
    %v140 = vsel %vm138, 1, 0
    %v141 = vcvt.s32.f32 %v139
    %v142 = vcvt.s32.f32 %v140
    %v143 = vadd.f32 %v129, %v141
    %v144 = vadd.f32 %v130, %v142
    %145 = vset.pattern.permute.xlu0 5
    %146 = vperm.xlu0 %145, %v71
    %v147 = vpop.permute.xlu0 %146
    %148 = vset.pattern.permute.xlu0 5
    %149 = vperm.xlu0 %148, %v72
    %v150 = vpop.permute.xlu0 %149
    %vm151 = vcmp.eq.s32.totalorder %v147, %v74
    %vm152 = vcmp.eq.s32.totalorder %v150, %v74
    %v153 = vsel %vm151, 1, 0
    %v154 = vsel %vm152, 1, 0
    %v155 = vcvt.s32.f32 %v153
    %v156 = vcvt.s32.f32 %v154
    %v157 = vadd.f32 %v143, %v155
    %v158 = vadd.f32 %v144, %v156
    %159 = vset.pattern.permute.xlu0 6
    %160 = vperm.xlu0 %159, %v71
    %v161 = vpop.permute.xlu0 %160
    %162 = vset.pattern.permute.xlu0 6
    %163 = vperm.xlu0 %162, %v72
    %v164 = vpop.permute.xlu0 %163
    %vm165 = vcmp.eq.s32.totalorder %v161, %v74
    %vm166 = vcmp.eq.s32.totalorder %v164, %v74
    %v167 = vsel %vm165, 1, 0
    %v168 = vsel %vm166, 1, 0
    %v169 = vcvt.s32.f32 %v167
    %v170 = vcvt.s32.f32 %v168
    %v171 = vadd.f32 %v157, %v169
    %v172 = vadd.f32 %v158, %v170
    %173 = vset.pattern.permute.xlu0 7
    %174 = vperm.xlu0 %173, %v71
    %v175 = vpop.permute.xlu0 %174
    %176 = vset.pattern.permute.xlu0 7
    %177 = vperm.xlu0 %176, %v72
    %v178 = vpop.permute.xlu0 %177
    %vm179 = vcmp.eq.s32.totalorder %v175, %v74
    %vm180 = vcmp.eq.s32.totalorder %v178, %v74
    %v181 = vsel %vm179, 1, 0
    %v182 = vsel %vm180, 1, 0
    %v183 = vcvt.s32.f32 %v181
    %v184 = vcvt.s32.f32 %v182
    %v185 = vadd.f32 %v171, %v183
    %v186 = vadd.f32 %v172, %v184
    %v187 = vpack.c.bf16 %v186, %v185
    %v188 = vld [vmem:[#allocation2] sm:$0xf]
    %v189 = vld [vmem:[#allocation2 + $0x4] sm:$0xf]
    %v190 = vld [vmem:[#allocation2 + $0x8] sm:$0xf]
    %v191 = vld [vmem:[#allocation2 + $0xc] sm:$0xf]
    %v192 = vld [vmem:[#allocation2 + $0x10] sm:$0xf]
    %v193 = vld [vmem:[#allocation2 + $0x14] sm:$0xf]
    %v194 = vld [vmem:[#allocation2 + $0x18] sm:$0xf]
    %v195 = vld [vmem:[#allocation2 + $0x1c] sm:$0xf]
    %v196 = vld [vmem:[#allocation2 + $0x20] sm:$0xf]
    %v197 = vld [vmem:[#allocation2 + $0x24] sm:$0xf]
    %v198 = vld [vmem:[#allocation2 + $0x28] sm:$0xf]
    %v199 = vld [vmem:[#allocation2 + $0x2c] sm:$0xf]
    %v200 = vld [vmem:[#allocation2 + $0x30] sm:$0xf]
    %v201 = vld [vmem:[#allocation2 + $0x34] sm:$0xf]
    %v202 = vld [vmem:[#allocation2 + $0x38] sm:$0xf]
    %v203 = vld [vmem:[#allocation2 + $0x3c] sm:$0xf]
    %v220 = vunpack.c.l.b16 %v188
    %v221 = vunpack.c.l.b16 %v189
    %v222 = vunpack.c.l.b16 %v190
    %v223 = vunpack.c.l.b16 %v191
    %v224 = vunpack.c.l.b16 %v192
    %v225 = vunpack.c.l.b16 %v193
    %v226 = vunpack.c.l.b16 %v194
    %v227 = vunpack.c.l.b16 %v195
    %v228 = vunpack.c.l.b16 %v196
    %v229 = vunpack.c.l.b16 %v197
    %v230 = vunpack.c.l.b16 %v198
    %v231 = vunpack.c.l.b16 %v199
    %v232 = vunpack.c.l.b16 %v200
    %v233 = vunpack.c.l.b16 %v201
    %v234 = vunpack.c.l.b16 %v202
    %v235 = vunpack.c.l.b16 %v203
    %v236 = vpack.c.b16 %v221, %v220
    %v237 = vpack.c.b16 %v223, %v222
    %v238 = vpack.c.b16 %v225, %v224
    %v239 = vpack.c.b16 %v227, %v226
    %v240 = vpack.c.b16 %v229, %v228
    %v241 = vpack.c.b16 %v231, %v230
    %v242 = vpack.c.b16 %v233, %v232
    %v243 = vpack.c.b16 %v235, %v234
    %252 = vmatpush.bf16.msra.mxu0 %v243
    %253 = vmatpush.bf16.msra.mxu0 %v242
    %254 = vmatpush.bf16.msra.mxu0 %v241
    %255 = vmatpush.bf16.msra.mxu0 %v240
    %256 = vmatpush.bf16.msra.mxu0 %v239
    %257 = vmatpush.bf16.msra.mxu0 %v238
    %258 = vmatpush.bf16.msra.mxu0 %v237
    %259 = vmatpush.bf16.msra.mxu0 %v236
    %260 = vmatmul.bf16.gmra.mxu0 %v187
    %v261 = vpop.f32.mrf.mxu0
    %v262 = vadd.f32 0.0, %v261
    %v263 = vpop.f32.mrf.mxu0
    %v264 = vadd.f32 0.0, %v263
    %265 = vdwg.mxu0
    %v266 = vmul.f32 %v262, 0.125
    %v267 = vmul.f32 %v264, 0.125
    %v268 = vpack.c.bf16 %v267, %v266
    %v269 = vld [vmem:[#allocation5] sm:$0xf]
    %v270 = vld [vmem:[#allocation5 + $0x4] sm:$0xf]
    %v271 = vld [vmem:[#allocation5 + $0x8] sm:$0xf]
    %v272 = vld [vmem:[#allocation5 + $0xc] sm:$0xf]
    %v273 = vld [vmem:[#allocation5 + $0x10] sm:$0xf]
    %v274 = vld [vmem:[#allocation5 + $0x14] sm:$0xf]
    %v275 = vld [vmem:[#allocation5 + $0x18] sm:$0xf]
    %v276 = vld [vmem:[#allocation5 + $0x1c] sm:$0xf]
    %v277 = vld [vmem:[#allocation5 + $0x20] sm:$0xf]
    %v278 = vld [vmem:[#allocation5 + $0x24] sm:$0xf]
    %v279 = vld [vmem:[#allocation5 + $0x28] sm:$0xf]
    %v280 = vld [vmem:[#allocation5 + $0x2c] sm:$0xf]
    %v281 = vld [vmem:[#allocation5 + $0x30] sm:$0xf]
    %v282 = vld [vmem:[#allocation5 + $0x34] sm:$0xf]
    %v283 = vld [vmem:[#allocation5 + $0x38] sm:$0xf]
    %v284 = vld [vmem:[#allocation5 + $0x3c] sm:$0xf]
    %v285 = vld [vmem:[%s3] sm:$0x1]
    %v287 = vperm.slane %v285, 0
    %v305 = vunpack.c.l.b16 %v269
    %v306 = vunpack.c.l.b16 %v270
    %v307 = vunpack.c.l.b16 %v271
    %v308 = vunpack.c.l.b16 %v272
    %v309 = vunpack.c.l.b16 %v273
    %v310 = vunpack.c.l.b16 %v274
    %v311 = vunpack.c.l.b16 %v275
    %v312 = vunpack.c.l.b16 %v276
    %v313 = vunpack.c.l.b16 %v277
    %v314 = vunpack.c.l.b16 %v278
    %v315 = vunpack.c.l.b16 %v279
    %v316 = vunpack.c.l.b16 %v280
    %v317 = vunpack.c.l.b16 %v281
    %v318 = vunpack.c.l.b16 %v282
    %v319 = vunpack.c.l.b16 %v283
    %v320 = vunpack.c.l.b16 %v284
    %v321 = vpack.c.b16 %v306, %v305
    %v322 = vpack.c.b16 %v308, %v307
    %v323 = vpack.c.b16 %v310, %v309
    %v324 = vpack.c.b16 %v312, %v311
    %v325 = vpack.c.b16 %v314, %v313
    %v326 = vpack.c.b16 %v316, %v315
    %v327 = vpack.c.b16 %v318, %v317
    %v328 = vpack.c.b16 %v320, %v319
    %337 = vmatpush.bf16.msra.mxu0 %v328
    %338 = vmatpush.bf16.msra.mxu0 %v327
    %339 = vmatpush.bf16.msra.mxu0 %v326
    %340 = vmatpush.bf16.msra.mxu0 %v325
    %341 = vmatpush.bf16.msra.mxu0 %v324
    %342 = vmatpush.bf16.msra.mxu0 %v323
    %343 = vmatpush.bf16.msra.mxu0 %v322
    %344 = vmatpush.bf16.msra.mxu0 %v321
    %345 = vmatmul.bf16.gmra.mxu0 %v268
    %v346 = vpop.f32.mrf.mxu0
    %v347 = vadd.f32 %v287, %v346
    %v348 = vpop.f32.mrf.mxu0
    %v349 = vadd.f32 %v287, %v348
    %350 = vdwg.mxu0
    %v351 = vmax.f32 %v347, 0.0
    %v352 = vmax.f32 %v349, 0.0
    %v353 = vpack.c.bf16 %v352, %v351
    %v354 = vld [vmem:[#allocation7] sm:$0xf]
    %v355 = vld [vmem:[#allocation7 + $0x4] sm:$0xf]
    %v356 = vld [vmem:[#allocation7 + $0x8] sm:$0xf]
    %v357 = vld [vmem:[#allocation7 + $0xc] sm:$0xf]
    %v358 = vld [vmem:[#allocation7 + $0x10] sm:$0xf]
    %v359 = vld [vmem:[#allocation7 + $0x14] sm:$0xf]
    %v360 = vld [vmem:[#allocation7 + $0x18] sm:$0xf]
    %v361 = vld [vmem:[#allocation7 + $0x1c] sm:$0xf]
    %v362 = vld [vmem:[#allocation7 + $0x20] sm:$0xf]
    %v363 = vld [vmem:[#allocation7 + $0x24] sm:$0xf]
    %v364 = vld [vmem:[#allocation7 + $0x28] sm:$0xf]
    %v365 = vld [vmem:[#allocation7 + $0x2c] sm:$0xf]
    %v366 = vld [vmem:[#allocation7 + $0x30] sm:$0xf]
    %v367 = vld [vmem:[#allocation7 + $0x34] sm:$0xf]
    %v368 = vld [vmem:[#allocation7 + $0x38] sm:$0xf]
    %v369 = vld [vmem:[#allocation7 + $0x3c] sm:$0xf]
    %v370 = vld [vmem:[%s5] sm:$0x1]
    %v372 = vperm.slane %v370, 0
    %v390 = vunpack.c.l.b16 %v354
    %v391 = vunpack.c.l.b16 %v355
    %v392 = vunpack.c.l.b16 %v356
    %v393 = vunpack.c.l.b16 %v357
    %v394 = vunpack.c.l.b16 %v358
    %v395 = vunpack.c.l.b16 %v359
    %v396 = vunpack.c.l.b16 %v360
    %v397 = vunpack.c.l.b16 %v361
    %v398 = vunpack.c.l.b16 %v362
    %v399 = vunpack.c.l.b16 %v363
    %v400 = vunpack.c.l.b16 %v364
    %v401 = vunpack.c.l.b16 %v365
    %v402 = vunpack.c.l.b16 %v366
    %v403 = vunpack.c.l.b16 %v367
    %v404 = vunpack.c.l.b16 %v368
    %v405 = vunpack.c.l.b16 %v369
    %v406 = vpack.c.b16 %v391, %v390
    %v407 = vpack.c.b16 %v393, %v392
    %v408 = vpack.c.b16 %v395, %v394
    %v409 = vpack.c.b16 %v397, %v396
    %v410 = vpack.c.b16 %v399, %v398
    %v411 = vpack.c.b16 %v401, %v400
    %v412 = vpack.c.b16 %v403, %v402
    %v413 = vpack.c.b16 %v405, %v404
    %422 = vmatpush.bf16.msra.mxu0 %v413
    %423 = vmatpush.bf16.msra.mxu0 %v412
    %424 = vmatpush.bf16.msra.mxu0 %v411
    %425 = vmatpush.bf16.msra.mxu0 %v410
    %426 = vmatpush.bf16.msra.mxu0 %v409
    %427 = vmatpush.bf16.msra.mxu0 %v408
    %428 = vmatpush.bf16.msra.mxu0 %v407
    %429 = vmatpush.bf16.msra.mxu0 %v406
    %430 = vmatmul.bf16.gmra.mxu0 %v353
    %v431 = vpop.f32.mrf.mxu0
    %v432 = vadd.f32 %v372, %v431
    %v433 = vpop.f32.mrf.mxu0
    %v434 = vadd.f32 %v372, %v433
    %435 = vdwg.mxu0
    %vm436 = vcmp.lt.s32.totalorder %v74, 8
    %v437 = vsel %vm436, %v432, -1e+30
    %v438 = vsel %vm436, %v434, -1e+30
    %439 = vmax.xlane.f32.xlu0 %v437
    %v440 = vpop.xlane.xlu0 %439
    %441 = vmax.xlane.f32.xlu0 %v438
    %v442 = vpop.xlane.xlu0 %441
    %v443 = vsub.f32 %v437, %v440
    %v444 = vsub.f32 %v438, %v442
    %v445 = vmul.f32 %v443, 1.442695
    %v446 = vpow.pop %v445
    %v447 = vmul.f32 %v444, 1.442695
    %v448 = vpow.pop %v447
    %449 = vadd.xlane.f32.xlu0 %v446
    %v450 = vpop.xlane.xlu0 %449
    %451 = vadd.xlane.f32.xlu0 %v448
    %v452 = vpop.xlane.xlu0 %451
    %v453 = vlog2.pop %v450
    %v454 = vmul.f32 %v453, 0.6931472
    %v455 = vlog2.pop %v452
    %v456 = vmul.f32 %v455, 0.6931472
    %v457 = vsub.f32 %v443, %v454
    %v458 = vsub.f32 %v444, %v456
    %459 = vst [vmem:[#allocation8] sm:$0xff] %v457
    %460 = vst [vmem:[#allocation8 + $0x8] sm:$0xff] %v458
    // Predicated region
    $region38: #{tpu_custom_call.1} parent=1 // pred_check
      _
    $region39: #{tpu_custom_call.1} parent=1 // pred_check_branch
      %462 = sbr.rel (0) target = $region41
    $region40: #{tpu_custom_call.1} parent=1 // pred_region
      %464 = vsyncadd [#allocation4], 0
      %s465 = sshll.u32 [#allocation8], 4
      %s466 = int_to_ptr.vmem [resolvable:$true] %s465
      %s467 = sshll.u32 %s6, 4
      %s468 = int_to_ptr.hbm [resolvable:$true] %s467
      %473 = dma.vmem_to_hbm [thread:$0]  %s466, 256, %s468, [#allocation4], 128, 128, 8
    $region41: #{tpu_custom_call.1} parent=1 // pred_fallthru
      _
    // Predicated region
    $region42: #{tpu_custom_call.1} parent=1 // pred_check
      _
    $region43: #{tpu_custom_call.1} parent=1 // pred_check_branch
      %475 = sbr.rel (0) target = $region45
    $region44: #{tpu_custom_call.1} parent=1 // pred_region
      %477 = dma.done [#allocation4], 256
    $region45: #{tpu_custom_call.1} parent=1 // pred_fallthru
      _
    %478 = vsyncpa [#allocation3], 1
    %479 = vsyncpa [#allocation6], 1
    %480 = vsyncpa [#allocation4], 1

</llo_original>
